<compile_context>
chip_gen: v5e
topology: v5e:2x2
jax: 0.10.0
libtpu: 0.0.40
codegen_flags: <defaults>
</compile_context>

<pallas_src>
import functools

import jax
import jax.numpy as jnp
from jax.experimental import pallas as pl
from jax.experimental.pallas import tpu as pltpu


def _round_up(a, b):
    return (a + b - 1) // b * b


def _clamp(k, lo, hi):
    return jnp.minimum(jnp.maximum(k, lo), hi)


# ---------------------------------------------------------------------------
# Pass 1: edge projection   msg = [rbf | angle | 0pad] @ W_feat + b_e
# ---------------------------------------------------------------------------
def _edge_proj_kernel(feat_ref, w_ref, b_ref, msg_ref):
    msg = jnp.dot(feat_ref[...], w_ref[...],
                  preferred_element_type=jnp.float32) + b_ref[...]
    msg_ref[...] = msg.astype(msg_ref.dtype)


# ---------------------------------------------------------------------------
# Pass 2: scatter-add (index_add_) via one-hot MXU matmul + update MLP + skip
# ---------------------------------------------------------------------------
def _scatter_update_kernel(kts_ref, kte_ref,             # scalar prefetch (SMEM)
                           row_ref, msg_ref, x_ref,
                           w1_ref, b1_ref, w2_ref, b2_ref,
                           o_ref, agg_ref):
    j = pl.program_id(0)                  # node-tile index  ("parallel")
    k = pl.program_id(1)                  # edge-tile index  (reduction)
    tile_n = agg_ref.shape[0]

    # Zero the per-node-tile accumulator at the start of the edge reduction.
    @pl.when(k == 0)
    def _():
        agg_ref[...] = jnp.zeros_like(agg_ref)

    # Edges are sorted by destination row, so only edge tiles in
    # [kts[j], kte[j]] can contain edges for this node tile.  Other tiles are
    # skipped: no one-hot, no matmul and (via the clamped index_map) no new DMA.
    @pl.when((k >= kts_ref[j]) & (k <= kte_ref[j]))
    def _():
        rows = row_ref[...]                                         # (1, tile_e)
        node_ids = j * tile_n + jax.lax.broadcasted_iota(
            jnp.int32, (tile_n, 1), 0)
        onehot = (node_ids == rows).astype(jnp.bfloat16)            # exact 0/1
        agg_ref[...] += jnp.dot(onehot, msg_ref[...],
                                preferred_element_type=jnp.float32)

    # After the last edge tile: residual + update MLP for this node tile.
    @pl.when(k == pl.num_programs(1) - 1)
    def _():
        agg = agg_ref[...].astype(jnp.bfloat16)
        h = jnp.dot(agg, w1_ref[...],
                    preferred_element_type=jnp.float32) + b1_ref[...]
        h = jnp.maximum(h, 0.0).astype(jnp.bfloat16)
        y = jnp.dot(h, w2_ref[...],
                    preferred_element_type=jnp.float32) + b2_ref[...]
        o_ref[...] = (x_ref[...].astype(jnp.float32) + y).astype(o_ref.dtype)


def gspherenet_forward(x, edge_index, rbf_feature, angle_feature, kparams,
                       *, tile_n=512, tile_e=2048):
    """GSphereNetLayer forward (two fused Pallas passes).

    x             : (N, D) node features (float32)
    edge_index    : (2, E) int   row = destination of index_add (col unused)
    rbf_feature   : (E, rbf_dim)
    angle_feature : (E, angle_dim)
    kparams       : dict from prepare_kernel_params (fused / transposed / bf16)
    """
    N, D = x.shape
    E = rbf_feature.shape[0]
    f = rbf_feature.shape[1] + angle_feature.shape[1]
    f_pad = kparams["w_feat"].shape[0]            # lane-padded feature dim

    # Tiles: clamp to the problem size and force (8, 128) alignment.
    tile_n = min(_round_up(tile_n, 8), _round_up(N, 8))
    tile_e = min(_round_up(tile_e, 128), _round_up(E, 128))
    n_pad = _round_up(N, tile_n)
    e_pad = _round_up(E, tile_e)
    n_tiles = n_pad // tile_n
    e_tiles = e_pad // tile_e

    row = edge_index[0].astype(jnp.int32)

    # Sort edges by destination node; fuse rbf|angle into one K=f_pad matrix.
    order = jnp.argsort(row)
    row_s = row[order]
    feat = jnp.concatenate([rbf_feature, angle_feature],
                           axis=-1).astype(jnp.bfloat16)
    feat_s = feat[order]

    feat_p = jnp.pad(feat_s, ((0, e_pad - E), (0, f_pad - f)))
    # Padded edges carry row == n_pad -> never match any node's one-hot column.
    row_flat = jnp.pad(row_s, (0, e_pad - E), constant_values=n_pad)
    row_p = row_flat.reshape(1, e_pad)
    x_p = jnp.pad(x, ((0, n_pad - N), (0, 0)))

    # Per-node-tile edge-tile ranges (scalar prefetch drives the tile skip).
    node_bounds = jnp.arange(n_tiles + 1, dtype=jnp.int32) * tile_n
    e_bounds = jnp.searchsorted(row_flat, node_bounds,
                                side="left").astype(jnp.int32)
    starts, ends = e_bounds[:-1], e_bounds[1:]
    kts = jnp.minimum(starts // tile_e, e_tiles - 1).astype(jnp.int32)
    kte = jnp.clip((ends + tile_e - 1) // tile_e - 1, 0, e_tiles - 1)
    kte = jnp.maximum(kte, kts).astype(jnp.int32)

    # ---- pass 1: edge projection (messages computed exactly once) ----------
    msg = pl.pallas_call(
        _edge_proj_kernel,
        out_shape=jax.ShapeDtypeStruct((e_pad, D), jnp.bfloat16),
        grid=(e_tiles,),
        in_specs=[
            pl.BlockSpec((tile_e, f_pad), lambda k: (k, 0)),   # fused features
            pl.BlockSpec((f_pad, D), lambda k: (0, 0)),        # fused W_e (in,out)
            pl.BlockSpec((1, D), lambda k: (0, 0)),            # b_e
        ],
        out_specs=pl.BlockSpec((tile_e, D), lambda k: (k, 0)),
        compiler_params=pltpu.CompilerParams(
            dimension_semantics=("parallel",)),
    )(feat_p, kparams["w_feat"], kparams["b_e"])

    # ---- pass 2: scatter-add + update MLP + residual ------------------------
    const = lambda shape: pl.BlockSpec(shape, lambda j, k, kts, kte: (0, 0))
    out = pl.pallas_call(
        _scatter_update_kernel,
        out_shape=jax.ShapeDtypeStruct((n_pad, D), x.dtype),
        grid_spec=pltpu.PrefetchScalarGridSpec(
            num_scalar_prefetch=2,
            grid=(n_tiles, e_tiles),
            in_specs=[
                pl.BlockSpec(                                   # row indices
                    (1, tile_e),
                    lambda j, k, kts, kte: (0, _clamp(k, kts[j], kte[j]))),
                pl.BlockSpec(                                   # messages (bf16)
                    (tile_e, D),
                    lambda j, k, kts, kte: (_clamp(k, kts[j], kte[j]), 0)),
                pl.BlockSpec((tile_n, D), lambda j, k, kts, kte: (j, 0)),  # x
                const((D, D)),                                  # update W1
                const((1, D)),                                  # update b1
                const((D, D)),                                  # update W2
                const((1, D)),                                  # update b2
            ],
            out_specs=pl.BlockSpec((tile_n, D), lambda j, k, kts, kte: (j, 0)),
            scratch_shapes=[pltpu.VMEM((tile_n, D), jnp.float32)],  # agg acc
        ),
        compiler_params=pltpu.CompilerParams(
            dimension_semantics=("parallel", "arbitrary")),
    )(kts, kte, row_p, msg, x_p,
      kparams["w_u1"], kparams["b_u1"], kparams["w_u2"], kparams["b_u2"])

    return out[:N]


def init_params(key, embed_dim, rbf_dim, angle_dim):
    """Torch-style Linear init; weights stored (out_features, in_features)."""
    ks = jax.random.split(key, 3)

    def lin(k, din, dout):
        kw, kb = jax.random.split(k)
        bound = 1.0 / jnp.sqrt(din)
        w = jax.random.uniform(kw, (dout, din), jnp.float32, -bound, bound)
        b = jax.random.uniform(kb, (dout,), jnp.float32, -bound, bound)
        return w, b

    w_e, b_e = lin(ks[0], rbf_dim + angle_dim, embed_dim)
    w_u1, b_u1 = lin(ks[1], embed_dim, embed_dim)
    w_u2, b_u2 = lin(ks[2], embed_dim, embed_dim)
    return dict(w_e=w_e, b_e=b_e, w_u1=w_u1, b_u1=b_u1, w_u2=w_u2, b_u2=b_u2)


def prepare_kernel_params(params):
    """One-time layout work (off the per-call path): fuse the concat projection
    weight into a single lane-padded (K, D) bf16 matrix in (in, out) layout,
    transpose the MLP weights, cast weights to bf16, keep biases 2-D f32."""
    w_e = params["w_e"]                        # (D, rbf+ang)
    D, f = w_e.shape
    f_pad = _round_up(f, 128)
    w_feat = jnp.zeros((f_pad, D), jnp.float32).at[:f, :].set(w_e.T)
    return dict(
        w_feat=w_feat.astype(jnp.bfloat16),
        b_e=params["b_e"][None, :].astype(jnp.float32),
        w_u1=params["w_u1"].T.astype(jnp.bfloat16),
        b_u1=params["b_u1"][None, :].astype(jnp.float32),
        w_u2=params["w_u2"].T.astype(jnp.bfloat16),
        b_u2=params["b_u2"][None, :].astype(jnp.float32),
    )


def reference_forward(x, edge_index, rbf_feature, angle_feature, params):
    """Pure-JAX f32 reference matching the torch module semantics exactly."""
    row = edge_index[0]
    edge_feat = jnp.concatenate([rbf_feature, angle_feature], axis=-1)
    msg = edge_feat @ params["w_e"].T + params["b_e"]
    agg = jnp.zeros_like(x).at[row].add(msg)
    h = jnp.maximum(agg @ params["w_u1"].T + params["b_u1"], 0.0)
    return x + h @ params["w_u2"].T + params["b_u2"]


if __name__ == "__main__":
    # Small shapes consistent with the module (embed_dim kept lane-aligned).
    embed_dim, rbf_dim, angle_dim = 128, 64, 32
    N, E = 50, 200                         # ragged on purpose (exercises padding)

    key = jax.random.PRNGKey(0)
    kx, kr, ka, ke1, ke2, kp = jax.random.split(key, 6)

    x = jax.random.normal(kx, (N, embed_dim), jnp.float32)
    rbf_feature = jax.random.normal(kr, (E, rbf_dim), jnp.float32)
    angle_feature = jax.random.normal(ka, (E, angle_dim), jnp.float32)
    row = jax.random.randint(ke1, (E,), 0, N, dtype=jnp.int32)
    col = jax.random.randint(ke2, (E,), 0, N, dtype=jnp.int32)   # unused by fwd
    edge_index = jnp.stack([row, col])

    params = init_params(kp, embed_dim, rbf_dim, angle_dim)
    kparams = prepare_kernel_params(params)

    ref = reference_forward(x, edge_index, rbf_feature, angle_feature, params)

    # Default (large) tiles — the production configuration.
    fwd = jax.jit(gspherenet_forward)
    out = jax.block_until_ready(
        fwd(x, edge_index, rbf_feature, angle_feature, kparams))
    assert out.shape == x.shape and out.dtype == x.dtype
    err = float(jnp.max(jnp.abs(out - ref)))
    assert jnp.allclose(out, ref, atol=2e-2, rtol=2e-2), f"max|err|={err:.3e}"

    # Small tiles — exercises the multi-tile scalar-prefetch scatter path
    # (several node tiles, several edge tiles, data-dependent index_map).
    fwd_small = jax.jit(
        functools.partial(gspherenet_forward, tile_n=16, tile_e=128))
    out_s = jax.block_until_ready(
        fwd_small(x, edge_index, rbf_feature, angle_feature, kparams))
    err_s = float(jnp.max(jnp.abs(out_s - ref)))
    assert jnp.allclose(out_s, ref, atol=2e-2, rtol=2e-2), f"max|err|={err_s:.3e}"

    # TODO(synk): for very large graphs, replace the static (n_tiles, e_tiles)
    # grid with a flat grid over visited (node-tile, edge-tile) pairs.
    print("KERNEL_OK")
</pallas_src>

<mosaic_0001>
module attributes {stable_mosaic.version = 11 : i64} {
  func.func @_edge_proj_kernel(%arg0: i32, %arg1: memref<256x128xbf16, #tpu.memory_space<vmem>>, %arg2: memref<128x128xbf16, #tpu.memory_space<vmem>>, %arg3: memref<1x128xf32, #tpu.memory_space<vmem>>, %arg4: memref<256x128xbf16, #tpu.memory_space<vmem>>) attributes {dimension_semantics = [#tpu.dimension_semantics<parallel>], iteration_bounds = array<i64: 1>, scalar_prefetch = 0 : i64, scratch_operands = 0 : i64, tpu.core_type = #tpu.core_type<tc>, window_params = [{transform_indices = @transform_0, window_bounds = array<i64: 256, 128>}, {pipeline_mode = #tpu.pipeline_mode<synchronous>, transform_indices = @transform_1, window_bounds = array<i64: 128, 128>}, {pipeline_mode = #tpu.pipeline_mode<synchronous>, transform_indices = @transform_2, window_bounds = array<i64: 1, 128>}, {transform_indices = @transform_3, window_bounds = array<i64: 256, 128>}]} {
    %c0 = arith.constant 0 : index
    %c0_0 = arith.constant 0 : index
    %0 = vector.load %arg1[%c0, %c0_0] : memref<256x128xbf16, #tpu.memory_space<vmem>>, vector<256x128xbf16>
    %c0_1 = arith.constant 0 : index
    %c0_2 = arith.constant 0 : index
    %1 = vector.load %arg2[%c0_1, %c0_2] : memref<128x128xbf16, #tpu.memory_space<vmem>>, vector<128x128xbf16>
    %cst = arith.constant dense<0.000000e+00> : vector<256x128xf32>
    %2 = tpu.matmul %0, %1, %cst {dimension_numbers = #tpu.dot_dimension_numbers<[1], [0], [0], [1], [0, 0, 1, 1], [], []>} : vector<256x128xbf16>, vector<128x128xbf16>, vector<256x128xf32> -> vector<256x128xf32>
    %c0_3 = arith.constant 0 : index
    %c0_4 = arith.constant 0 : index
    %3 = vector.load %arg3[%c0_3, %c0_4] : memref<1x128xf32, #tpu.memory_space<vmem>>, vector<1x128xf32>
    %4 = vector.broadcast %3 : vector<1x128xf32> to vector<256x128xf32>
    %5 = arith.addf %2, %4 : vector<256x128xf32>
    %6 = arith.truncf %5 : vector<256x128xf32> to vector<256x128xbf16>
    %c0_5 = arith.constant 0 : index
    %c0_6 = arith.constant 0 : index
    %7 = vector.load %arg4[%c0_5, %c0_6] : memref<256x128xbf16, #tpu.memory_space<vmem>>, vector<256x128xbf16>
    tpu.vector_store %arg4[%c0_5, %c0_6], %6 {strides = array<i32>} : memref<256x128xbf16, #tpu.memory_space<vmem>>, vector<256x128xbf16>,
    return
  }
  func.func @transform_0(%arg0: i32) -> (i32, i32) {
    %c0_i32 = arith.constant 0 : i32
    %c0_i32_0 = arith.constant 0 : i32
    return %arg0, %c0_i32 : i32, i32
  }
  func.func @transform_1(%arg0: i32) -> (i32, i32) {
    %c0_i32 = arith.constant 0 : i32
    %c0_i32_0 = arith.constant 0 : i32
    %c0_i32_1 = arith.constant 0 : i32
    return %c0_i32, %c0_i32_0 : i32, i32
  }
  func.func @transform_2(%arg0: i32) -> (i32, i32) {
    %c0_i32 = arith.constant 0 : i32
    %c0_i32_0 = arith.constant 0 : i32
    %c0_i32_1 = arith.constant 0 : i32
    return %c0_i32, %c0_i32_0 : i32, i32
  }
  func.func @transform_3(%arg0: i32) -> (i32, i32) {
    %c0_i32 = arith.constant 0 : i32
    %c0_i32_0 = arith.constant 0 : i32
    return %arg0, %c0_i32 : i32, i32
  }
}

module attributes {stable_mosaic.version = 11 : i64} {
  func.func @_scatter_update_kernel(%arg0: i32, %arg1: i32, %arg2: memref<1xi32, #tpu.memory_space<smem>>, %arg3: memref<1xi32, #tpu.memory_space<smem>>, %arg4: memref<1x256xi32, #tpu.memory_space<vmem>>, %arg5: memref<256x128xbf16, #tpu.memory_space<vmem>>, %arg6: memref<56x128xf32, #tpu.memory_space<vmem>>, %arg7: memref<128x128xbf16, #tpu.memory_space<vmem>>, %arg8: memref<1x128xf32, #tpu.memory_space<vmem>>, %arg9: memref<128x128xbf16, #tpu.memory_space<vmem>>, %arg10: memref<1x128xf32, #tpu.memory_space<vmem>>, %arg11: memref<56x128xf32, #tpu.memory_space<vmem>>, %arg12: memref<56x128xf32, #tpu.memory_space<vmem>>) attributes {dimension_semantics = [#tpu.dimension_semantics<parallel>, #tpu.dimension_semantics<arbitrary>], iteration_bounds = array<i64: 1, 1>, scalar_prefetch = 2 : i64, scratch_operands = 1 : i64, tpu.core_type = #tpu.core_type<tc>, window_params = [{transform_indices = @transform_0, window_bounds = array<i64: 1, 256>}, {transform_indices = @transform_1, window_bounds = array<i64: 256, 128>}, {transform_indices = @transform_2, window_bounds = array<i64: 56, 128>}, {pipeline_mode = #tpu.pipeline_mode<synchronous>, transform_indices = @transform_3, window_bounds = array<i64: 128, 128>}, {pipeline_mode = #tpu.pipeline_mode<synchronous>, transform_indices = @transform_4, window_bounds = array<i64: 1, 128>}, {pipeline_mode = #tpu.pipeline_mode<synchronous>, transform_indices = @transform_5, window_bounds = array<i64: 128, 128>}, {pipeline_mode = #tpu.pipeline_mode<synchronous>, transform_indices = @transform_6, window_bounds = array<i64: 1, 128>}, {transform_indices = @transform_7, window_bounds = array<i64: 56, 128>}]} {
    %c0_i32 = arith.constant 0 : i32
    %0 = arith.cmpi eq, %arg1, %c0_i32 : i32
    %1 = arith.extui %0 : i1 to i32
    %c0_i32_0 = arith.constant 0 : i32
    %2 = arith.cmpi ne, %1, %c0_i32_0 : i32
    scf.if %2 {
      %cst = arith.constant 0.000000e+00 : f32
      %15 = vector.broadcast %cst : f32 to vector<56x128xf32>
      %c0 = arith.constant 0 : index
      %c0_4 = arith.constant 0 : index
      %16 = vector.load %arg12[%c0, %c0_4] : memref<56x128xf32, #tpu.memory_space<vmem>>, vector<56x128xf32>
      tpu.vector_store %arg12[%c0, %c0_4], %15 {strides = array<i32>} : memref<56x128xf32, #tpu.memory_space<vmem>>, vector<56x128xf32>,
    } else {
    }
    %3 = arith.index_cast %arg0 : i32 to index
    %4 = memref.load %arg2[%3] : memref<1xi32, #tpu.memory_space<smem>>
    %5 = arith.cmpi sge, %arg1, %4 : i32
    %6 = arith.index_cast %arg0 : i32 to index
    %7 = memref.load %arg3[%6] : memref<1xi32, #tpu.memory_space<smem>>
    %8 = arith.cmpi sle, %arg1, %7 : i32
    %9 = arith.andi %5, %8 : i1
    %10 = arith.extui %9 : i1 to i32
    %c0_i32_1 = arith.constant 0 : i32
    %11 = arith.cmpi ne, %10, %c0_i32_1 : i32
    scf.if %11 {
      %c0 = arith.constant 0 : index
      %c0_4 = arith.constant 0 : index
      %15 = vector.load %arg4[%c0, %c0_4] : memref<1x256xi32, #tpu.memory_space<vmem>>, vector<1x256xi32>
      %c56_i32 = arith.constant 56 : i32
      %16 = arith.muli %arg0, %c56_i32 : i32
      %17 = tpu.iota {dimensions = array<i32: 0>} : vector<56x1xi32>
      %18 = vector.broadcast %16 : i32 to vector<56x1xi32>
      %19 = arith.addi %18, %17 : vector<56x1xi32>
      %20 = vector.broadcast %19 : vector<56x1xi32> to vector<56x256xi32>
      %21 = vector.broadcast %15 : vector<1x256xi32> to vector<56x256xi32>
      %22 = arith.cmpi eq, %20, %21 : vector<56x256xi32>
      %23 = arith.extui %22 : vector<56x256xi1> to vector<56x256xi32>
      %24 = arith.sitofp %23 : vector<56x256xi32> to vector<56x256xf32>
      %25 = arith.truncf %24 : vector<56x256xf32> to vector<56x256xbf16>
      %c0_5 = arith.constant 0 : index
      %c0_6 = arith.constant 0 : index
      %26 = vector.load %arg12[%c0_5, %c0_6] : memref<56x128xf32, #tpu.memory_space<vmem>>, vector<56x128xf32>
      %c0_7 = arith.constant 0 : index
      %c0_8 = arith.constant 0 : index
      %27 = vector.load %arg5[%c0_7, %c0_8] : memref<256x128xbf16, #tpu.memory_space<vmem>>, vector<256x128xbf16>
      %cst = arith.constant dense<0.000000e+00> : vector<56x128xf32>
      %28 = tpu.matmul %25, %27, %cst {dimension_numbers = #tpu.dot_dimension_numbers<[1], [0], [0], [1], [0, 0, 1, 1], [], []>} : vector<56x256xbf16>, vector<256x128xbf16>, vector<56x128xf32> -> vector<56x128xf32>
      %29 = arith.addf %26, %28 : vector<56x128xf32>
      %c0_9 = arith.constant 0 : index
      %c0_10 = arith.constant 0 : index
      %30 = vector.load %arg12[%c0_9, %c0_10] : memref<56x128xf32, #tpu.memory_space<vmem>>, vector<56x128xf32>
      tpu.vector_store %arg12[%c0_9, %c0_10], %29 {strides = array<i32>} : memref<56x128xf32, #tpu.memory_space<vmem>>, vector<56x128xf32>,
    } else {
    }
    %c0_i32_2 = arith.constant 0 : i32
    %12 = arith.cmpi eq, %arg1, %c0_i32_2 : i32
    %13 = arith.extui %12 : i1 to i32
    %c0_i32_3 = arith.constant 0 : i32
    %14 = arith.cmpi ne, %13, %c0_i32_3 : i32
    scf.if %14 {
      %c0 = arith.constant 0 : index
      %c0_4 = arith.constant 0 : index
      %15 = vector.load %arg12[%c0, %c0_4] : memref<56x128xf32, #tpu.memory_space<vmem>>, vector<56x128xf32>
      %16 = arith.truncf %15 : vector<56x128xf32> to vector<56x128xbf16>
      %c0_5 = arith.constant 0 : index
      %c0_6 = arith.constant 0 : index
      %17 = vector.load %arg7[%c0_5, %c0_6] : memref<128x128xbf16, #tpu.memory_space<vmem>>, vector<128x128xbf16>
      %cst = arith.constant dense<0.000000e+00> : vector<56x128xf32>
      %18 = tpu.matmul %16, %17, %cst {dimension_numbers = #tpu.dot_dimension_numbers<[1], [0], [0], [1], [0, 0, 1, 1], [], []>} : vector<56x128xbf16>, vector<128x128xbf16>, vector<56x128xf32> -> vector<56x128xf32>
      %c0_7 = arith.constant 0 : index
      %c0_8 = arith.constant 0 : index
      %19 = vector.load %arg8[%c0_7, %c0_8] : memref<1x128xf32, #tpu.memory_space<vmem>>, vector<1x128xf32>
      %20 = vector.broadcast %19 : vector<1x128xf32> to vector<56x128xf32>
      %21 = arith.addf %18, %20 : vector<56x128xf32>
      %cst_9 = arith.constant 0.000000e+00 : f32
      %22 = vector.broadcast %cst_9 : f32 to vector<56x128xf32>
      %23 = arith.maximumf %21, %22 : vector<56x128xf32>
      %24 = arith.truncf %23 : vector<56x128xf32> to vector<56x128xbf16>
      %c0_10 = arith.constant 0 : index
      %c0_11 = arith.constant 0 : index
      %25 = vector.load %arg9[%c0_10, %c0_11] : memref<128x128xbf16, #tpu.memory_space<vmem>>, vector<128x128xbf16>
      %cst_12 = arith.constant dense<0.000000e+00> : vector<56x128xf32>
      %26 = tpu.matmul %24, %25, %cst_12 {dimension_numbers = #tpu.dot_dimension_numbers<[1], [0], [0], [1], [0, 0, 1, 1], [], []>} : vector<56x128xbf16>, vector<128x128xbf16>, vector<56x128xf32> -> vector<56x128xf32>
      %c0_13 = arith.constant 0 : index
      %c0_14 = arith.constant 0 : index
      %27 = vector.load %arg10[%c0_13, %c0_14] : memref<1x128xf32, #tpu.memory_space<vmem>>, vector<1x128xf32>
      %28 = vector.broadcast %27 : vector<1x128xf32> to vector<56x128xf32>
      %29 = arith.addf %26, %28 : vector<56x128xf32>
      %c0_15 = arith.constant 0 : index
      %c0_16 = arith.constant 0 : index
      %30 = vector.load %arg6[%c0_15, %c0_16] : memref<56x128xf32, #tpu.memory_space<vmem>>, vector<56x128xf32>
      %31 = arith.addf %30, %29 : vector<56x128xf32>
      %c0_17 = arith.constant 0 : index
      %c0_18 = arith.constant 0 : index
      %32 = vector.load %arg11[%c0_17, %c0_18] : memref<56x128xf32, #tpu.memory_space<vmem>>, vector<56x128xf32>
      tpu.vector_store %arg11[%c0_17, %c0_18], %31 {strides = array<i32>} : memref<56x128xf32, #tpu.memory_space<vmem>>, vector<56x128xf32>,
    } else {
    }
    return
  }
  func.func @transform_0(%arg0: i32, %arg1: i32, %arg2: memref<1xi32, #tpu.memory_space<smem>>, %arg3: memref<1xi32, #tpu.memory_space<smem>>) -> (i32, i32) {
    %0 = arith.index_cast %arg0 : i32 to index
    %1 = memref.load %arg2[%0] : memref<1xi32, #tpu.memory_space<smem>>
    %2 = arith.index_cast %arg0 : i32 to index
    %3 = memref.load %arg3[%2] : memref<1xi32, #tpu.memory_space<smem>>
    %4 = arith.maxsi %arg1, %1 : i32
    %5 = arith.minsi %4, %3 : i32
    %c0_i32 = arith.constant 0 : i32
    %c0_i32_0 = arith.constant 0 : i32
    return %c0_i32, %5 : i32, i32
  }
  func.func @transform_1(%arg0: i32, %arg1: i32, %arg2: memref<1xi32, #tpu.memory_space<smem>>, %arg3: memref<1xi32, #tpu.memory_space<smem>>) -> (i32, i32) {
    %0 = arith.index_cast %arg0 : i32 to index
    %1 = memref.load %arg2[%0] : memref<1xi32, #tpu.memory_space<smem>>
    %2 = arith.index_cast %arg0 : i32 to index
    %3 = memref.load %arg3[%2] : memref<1xi32, #tpu.memory_space<smem>>
    %4 = arith.maxsi %arg1, %1 : i32
    %5 = arith.minsi %4, %3 : i32
    %c0_i32 = arith.constant 0 : i32
    %c0_i32_0 = arith.constant 0 : i32
    return %5, %c0_i32 : i32, i32
  }
  func.func @transform_2(%arg0: i32, %arg1: i32, %arg2: memref<1xi32, #tpu.memory_space<smem>>, %arg3: memref<1xi32, #tpu.memory_space<smem>>) -> (i32, i32) {
    %c0_i32 = arith.constant 0 : i32
    %c0_i32_0 = arith.constant 0 : i32
    return %arg0, %c0_i32 : i32, i32
  }
  func.func @transform_3(%arg0: i32, %arg1: i32, %arg2: memref<1xi32, #tpu.memory_space<smem>>, %arg3: memref<1xi32, #tpu.memory_space<smem>>) -> (i32, i32) {
    %c0_i32 = arith.constant 0 : i32
    %c0_i32_0 = arith.constant 0 : i32
    %c0_i32_1 = arith.constant 0 : i32
    return %c0_i32, %c0_i32_0 : i32, i32
  }
  func.func @transform_4(%arg0: i32, %arg1: i32, %arg2: memref<1xi32, #tpu.memory_space<smem>>, %arg3: memref<1xi32, #tpu.memory_space<smem>>) -> (i32, i32) {
    %c0_i32 = arith.constant 0 : i32
    %c0_i32_0 = arith.constant 0 : i32
    %c0_i32_1 = arith.constant 0 : i32
    return %c0_i32, %c0_i32_0 : i32, i32
  }
  func.func @transform_5(%arg0: i32, %arg1: i32, %arg2: memref<1xi32, #tpu.memory_space<smem>>, %arg3: memref<1xi32, #tpu.memory_space<smem>>) -> (i32, i32) {
    %c0_i32 = arith.constant 0 : i32
    %c0_i32_0 = arith.constant 0 : i32
    %c0_i32_1 = arith.constant 0 : i32
    return %c0_i32, %c0_i32_0 : i32, i32
  }
  func.func @transform_6(%arg0: i32, %arg1: i32, %arg2: memref<1xi32, #tpu.memory_space<smem>>, %arg3: memref<1xi32, #tpu.memory_space<smem>>) -> (i32, i32) {
    %c0_i32 = arith.constant 0 : i32
    %c0_i32_0 = arith.constant 0 : i32
    %c0_i32_1 = arith.constant 0 : i32
    return %c0_i32, %c0_i32_0 : i32, i32
  }
  func.func @transform_7(%arg0: i32, %arg1: i32, %arg2: memref<1xi32, #tpu.memory_space<smem>>, %arg3: memref<1xi32, #tpu.memory_space<smem>>) -> (i32, i32) {
    %c0_i32 = arith.constant 0 : i32
    %c0_i32_0 = arith.constant 0 : i32
    return %arg0, %c0_i32 : i32, i32
  }
}

</mosaic_0001>

<llo_original>
// kernel: custom-call
$region0: #{custom-call}
  %s0 = inlined_call_operand.vmem [shape: u32[2], index: 0, kind: output, shape index: {}]

// kernel: gspherenet_forward.2
$region0: #{gspherenet_forward.2}
  #allocation0 [shape = 'u32[]', space=smem, size = 0x4, offset = 0x4, fixed_abs, tag = 'smem constant byte address 0x4 - core index']
  #allocation1 [shape = 'u32[72,128]{1,0:T(1,128)}', space=vmem, size = 0x9000, scoped, tag = 'internal scratch']
  %s0 = inlined_call_operand.vmem [shape: bf16[256,128], index: 0, kind: input, shape index: {}]
  %s1 = inlined_call_operand.vmem [shape: bf16[128,128], index: 1, kind: input, shape index: {}]
  %s2 = inlined_call_operand.vmem [shape: f32[1,128], index: 2, kind: input, shape index: {}]
  %s3 = inlined_call_operand.vmem [shape: bf16[256,128], index: 3, kind: output, shape index: {}]
  %s4 = sld [smem:[#allocation0]]
  $region22: #{gspherenet_forward.2} parent=0
    _
  %s6 = ssub.s32 1, %s4
  %s7 = scalar_select 0, %s6, %s4
  // Predicated region
  $region2: #{gspherenet_forward.2} parent=0 // pred_check
    _
  $region3: #{gspherenet_forward.2} parent=0 // pred_check_branch
    %9 = sbr.rel (0) target = $region5
  $region4: #{gspherenet_forward.2} parent=0 // pred_region
    _
  $region5: #{gspherenet_forward.2} parent=0 // pred_fallthru
    _
  // Predicated region
  $region6: #{gspherenet_forward.2} parent=0 // pred_check
    _
  $region7: #{gspherenet_forward.2} parent=0 // pred_check_branch
    %11 = sbr.rel (0) target = $region9
  $region8: #{gspherenet_forward.2} parent=0 // pred_region
    _
  $region9: #{gspherenet_forward.2} parent=0 // pred_fallthru
    _
  // Predicated region
  $region10: #{gspherenet_forward.2} parent=0 // pred_check
    _
  $region11: #{gspherenet_forward.2} parent=0 // pred_check_branch
    %13 = sbr.rel (0) target = $region13
  $region12: #{gspherenet_forward.2} parent=0 // pred_region
    _
  $region13: #{gspherenet_forward.2} parent=0 // pred_fallthru
    _
  %v14 = vld [vmem:[%s0] sm:$0xf]
  %v15 = vld [vmem:[%s0 + $0x4] sm:$0xf]
  %v16 = vld [vmem:[%s0 + $0x8] sm:$0xf]
  %v17 = vld [vmem:[%s0 + $0xc] sm:$0xf]
  %v18 = vld [vmem:[%s0 + $0x10] sm:$0xf]
  %v19 = vld [vmem:[%s0 + $0x14] sm:$0xf]
  %v20 = vld [vmem:[%s0 + $0x18] sm:$0xf]
  %v21 = vld [vmem:[%s0 + $0x1c] sm:$0xf]
  %v22 = vld [vmem:[%s0 + $0x20] sm:$0xf]
  %v23 = vld [vmem:[%s0 + $0x24] sm:$0xf]
  %v24 = vld [vmem:[%s0 + $0x28] sm:$0xf]
  %v25 = vld [vmem:[%s0 + $0x2c] sm:$0xf]
  %v26 = vld [vmem:[%s0 + $0x30] sm:$0xf]
  %v27 = vld [vmem:[%s0 + $0x34] sm:$0xf]
  %v28 = vld [vmem:[%s0 + $0x38] sm:$0xf]
  %v29 = vld [vmem:[%s0 + $0x3c] sm:$0xf]
  %v30 = vld [vmem:[%s0 + $0x40] sm:$0xf]
  %v31 = vld [vmem:[%s0 + $0x44] sm:$0xf]
  %v32 = vld [vmem:[%s0 + $0x48] sm:$0xf]
  %v33 = vld [vmem:[%s0 + $0x4c] sm:$0xf]
  %v34 = vld [vmem:[%s0 + $0x50] sm:$0xf]
  %v35 = vld [vmem:[%s0 + $0x54] sm:$0xf]
  %v36 = vld [vmem:[%s0 + $0x58] sm:$0xf]
  %v37 = vld [vmem:[%s0 + $0x5c] sm:$0xf]
  %v38 = vld [vmem:[%s0 + $0x60] sm:$0xf]
  %v39 = vld [vmem:[%s0 + $0x64] sm:$0xf]
  %v40 = vld [vmem:[%s0 + $0x68] sm:$0xf]
  %v41 = vld [vmem:[%s0 + $0x6c] sm:$0xf]
  %v42 = vld [vmem:[%s0 + $0x70] sm:$0xf]
  %v43 = vld [vmem:[%s0 + $0x74] sm:$0xf]
  %v44 = vld [vmem:[%s0 + $0x78] sm:$0xf]
  %v45 = vld [vmem:[%s0 + $0x7c] sm:$0xf]
  %v46 = vld [vmem:[%s1] sm:$0xf]
  %v47 = vld [vmem:[%s1 + $0x4] sm:$0xf]
  %v48 = vld [vmem:[%s1 + $0x8] sm:$0xf]
  %v49 = vld [vmem:[%s1 + $0xc] sm:$0xf]
  %v50 = vld [vmem:[%s1 + $0x10] sm:$0xf]
  %v51 = vld [vmem:[%s1 + $0x14] sm:$0xf]
  %v52 = vld [vmem:[%s1 + $0x18] sm:$0xf]
  %v53 = vld [vmem:[%s1 + $0x1c] sm:$0xf]
  %v54 = vld [vmem:[%s1 + $0x20] sm:$0xf]
  %v55 = vld [vmem:[%s1 + $0x24] sm:$0xf]
  %v56 = vld [vmem:[%s1 + $0x28] sm:$0xf]
  %v57 = vld [vmem:[%s1 + $0x2c] sm:$0xf]
  %v58 = vld [vmem:[%s1 + $0x30] sm:$0xf]
  %v59 = vld [vmem:[%s1 + $0x34] sm:$0xf]
  %v60 = vld [vmem:[%s1 + $0x38] sm:$0xf]
  %v61 = vld [vmem:[%s1 + $0x3c] sm:$0xf]
  %v62 = vld [vmem:[%s2] sm:$0x1]
  %v64 = vperm.slane %v62, 0
  %v98 = vunpack.c.l.b16 %v14
  %v99 = vunpack.c.l.b16 %v15
  %v100 = vunpack.c.l.b16 %v16
  %v101 = vunpack.c.l.b16 %v17
  %v102 = vunpack.c.l.b16 %v18
  %v103 = vunpack.c.l.b16 %v19
  %v104 = vunpack.c.l.b16 %v20
  %v105 = vunpack.c.l.b16 %v21
  %v106 = vunpack.c.l.b16 %v22
  %v107 = vunpack.c.l.b16 %v23
  %v108 = vunpack.c.l.b16 %v24
  %v109 = vunpack.c.l.b16 %v25
  %v110 = vunpack.c.l.b16 %v26
  %v111 = vunpack.c.l.b16 %v27
  %v112 = vunpack.c.l.b16 %v28
  %v113 = vunpack.c.l.b16 %v29
  %v114 = vunpack.c.l.b16 %v30
  %v115 = vunpack.c.l.b16 %v31
  %v116 = vunpack.c.l.b16 %v32
  %v117 = vunpack.c.l.b16 %v33
  %v118 = vunpack.c.l.b16 %v34
  %v119 = vunpack.c.l.b16 %v35
  %v120 = vunpack.c.l.b16 %v36
  %v121 = vunpack.c.l.b16 %v37
  %v122 = vunpack.c.l.b16 %v38
  %v123 = vunpack.c.l.b16 %v39
  %v124 = vunpack.c.l.b16 %v40
  %v125 = vunpack.c.l.b16 %v41
  %v126 = vunpack.c.l.b16 %v42
  %v127 = vunpack.c.l.b16 %v43
  %v128 = vunpack.c.l.b16 %v44
  %v129 = vunpack.c.l.b16 %v45
  %v130 = vpack.c.b16 %v99, %v98
  %v131 = vpack.c.b16 %v101, %v100
  %v132 = vpack.c.b16 %v103, %v102
  %v133 = vpack.c.b16 %v105, %v104
  %v134 = vpack.c.b16 %v107, %v106
  %v135 = vpack.c.b16 %v109, %v108
  %v136 = vpack.c.b16 %v111, %v110
  %v137 = vpack.c.b16 %v113, %v112
  %v138 = vpack.c.b16 %v115, %v114
  %v139 = vpack.c.b16 %v117, %v116
  %v140 = vpack.c.b16 %v119, %v118
  %v141 = vpack.c.b16 %v121, %v120
  %v142 = vpack.c.b16 %v123, %v122
  %v143 = vpack.c.b16 %v125, %v124
  %v144 = vpack.c.b16 %v127, %v126
  %v145 = vpack.c.b16 %v129, %v128
  %v178 = vunpack.c.l.b16 %v46
  %v179 = vunpack.c.l.b16 %v47
  %v180 = vunpack.c.l.b16 %v48
  %v181 = vunpack.c.l.b16 %v49
  %v182 = vunpack.c.l.b16 %v50
  %v183 = vunpack.c.l.b16 %v51
  %v184 = vunpack.c.l.b16 %v52
  %v185 = vunpack.c.l.b16 %v53
  %v186 = vunpack.c.l.b16 %v54
  %v187 = vunpack.c.l.b16 %v55
  %v188 = vunpack.c.l.b16 %v56
  %v189 = vunpack.c.l.b16 %v57
  %v190 = vunpack.c.l.b16 %v58
  %v191 = vunpack.c.l.b16 %v59
  %v192 = vunpack.c.l.b16 %v60
  %v193 = vunpack.c.l.b16 %v61
  %v194 = vpack.c.b16 %v179, %v178
  %v195 = vpack.c.b16 %v181, %v180
  %v196 = vpack.c.b16 %v183, %v182
  %v197 = vpack.c.b16 %v185, %v184
  %v198 = vpack.c.b16 %v187, %v186
  %v199 = vpack.c.b16 %v189, %v188
  %v200 = vpack.c.b16 %v191, %v190
  %v201 = vpack.c.b16 %v193, %v192
  %210 = vmatpush.bf16.msra.mxu0 %v201
  %211 = vmatpush.bf16.msra.mxu0 %v200
  %212 = vmatpush.bf16.msra.mxu0 %v199
  %213 = vmatpush.bf16.msra.mxu0 %v198
  %214 = vmatpush.bf16.msra.mxu0 %v197
  %215 = vmatpush.bf16.msra.mxu0 %v196
  %216 = vmatpush.bf16.msra.mxu0 %v195
  %217 = vmatpush.bf16.msra.mxu0 %v194
  %218 = vmatmul.bf16.gmra.mxu0 %v130
  %v219 = vpop.f32.mrf.mxu0
  %v220 = vadd.f32 %v64, %v219
  %v221 = vpop.f32.mrf.mxu0
  %v222 = vadd.f32 %v64, %v221
  %223 = vmatmul.bf16.gmra.mxu0 %v131
  %v224 = vpop.f32.mrf.mxu0
  %v225 = vadd.f32 %v64, %v224
  %v226 = vpop.f32.mrf.mxu0
  %v227 = vadd.f32 %v64, %v226
  %228 = vmatmul.bf16.gmra.mxu0 %v132
  %v229 = vpop.f32.mrf.mxu0
  %v230 = vadd.f32 %v64, %v229
  %v231 = vpop.f32.mrf.mxu0
  %v232 = vadd.f32 %v64, %v231
  %233 = vmatmul.bf16.gmra.mxu0 %v133
  %v234 = vpop.f32.mrf.mxu0
  %v235 = vadd.f32 %v64, %v234
  %v236 = vpop.f32.mrf.mxu0
  %v237 = vadd.f32 %v64, %v236
  %238 = vmatmul.bf16.gmra.mxu0 %v134
  %v239 = vpop.f32.mrf.mxu0
  %v240 = vadd.f32 %v64, %v239
  %v241 = vpop.f32.mrf.mxu0
  %v242 = vadd.f32 %v64, %v241
  %243 = vmatmul.bf16.gmra.mxu0 %v135
  %v244 = vpop.f32.mrf.mxu0
  %v245 = vadd.f32 %v64, %v244
  %v246 = vpop.f32.mrf.mxu0
  %v247 = vadd.f32 %v64, %v246
  %248 = vmatmul.bf16.gmra.mxu0 %v136
  %v249 = vpop.f32.mrf.mxu0
  %v250 = vadd.f32 %v64, %v249
  %v251 = vpop.f32.mrf.mxu0
  %v252 = vadd.f32 %v64, %v251
  %253 = vmatmul.bf16.gmra.mxu0 %v137
  %v254 = vpop.f32.mrf.mxu0
  %v255 = vadd.f32 %v64, %v254
  %v256 = vpop.f32.mrf.mxu0
  %v257 = vadd.f32 %v64, %v256
  %258 = vmatmul.bf16.gmra.mxu0 %v138
  %v259 = vpop.f32.mrf.mxu0
  %v260 = vadd.f32 %v64, %v259
  %v261 = vpop.f32.mrf.mxu0
  %v262 = vadd.f32 %v64, %v261
  %263 = vmatmul.bf16.gmra.mxu0 %v139
  %v264 = vpop.f32.mrf.mxu0
  %v265 = vadd.f32 %v64, %v264
  %v266 = vpop.f32.mrf.mxu0
  %v267 = vadd.f32 %v64, %v266
  %268 = vmatmul.bf16.gmra.mxu0 %v140
  %v269 = vpop.f32.mrf.mxu0
  %v270 = vadd.f32 %v64, %v269
  %v271 = vpop.f32.mrf.mxu0
  %v272 = vadd.f32 %v64, %v271
  %273 = vmatmul.bf16.gmra.mxu0 %v141
  %v274 = vpop.f32.mrf.mxu0
  %v275 = vadd.f32 %v64, %v274
  %v276 = vpop.f32.mrf.mxu0
  %v277 = vadd.f32 %v64, %v276
  %278 = vmatmul.bf16.gmra.mxu0 %v142
  %v279 = vpop.f32.mrf.mxu0
  %v280 = vadd.f32 %v64, %v279
  %v281 = vpop.f32.mrf.mxu0
  %v282 = vadd.f32 %v64, %v281
  %283 = vmatmul.bf16.gmra.mxu0 %v143
  %v284 = vpop.f32.mrf.mxu0
  %v285 = vadd.f32 %v64, %v284
  %v286 = vpop.f32.mrf.mxu0
  %v287 = vadd.f32 %v64, %v286
  %288 = vmatmul.bf16.gmra.mxu0 %v144
  %v289 = vpop.f32.mrf.mxu0
  %v290 = vadd.f32 %v64, %v289
  %v291 = vpop.f32.mrf.mxu0
  %v292 = vadd.f32 %v64, %v291
  %293 = vmatmul.bf16.gmra.mxu0 %v145
  %v294 = vpop.f32.mrf.mxu0
  %v295 = vadd.f32 %v64, %v294
  %v296 = vpop.f32.mrf.mxu0
  %v297 = vadd.f32 %v64, %v296
  %298 = vdwg.mxu0
  %v299 = vpack.c.bf16 %v220, %v220
  %v300 = vpack.c.bf16 %v222, %v222
  %v301 = vpack.c.bf16 %v225, %v225
  %v302 = vpack.c.bf16 %v227, %v227
  %v303 = vpack.c.bf16 %v230, %v230
  %v304 = vpack.c.bf16 %v232, %v232
  %v305 = vpack.c.bf16 %v235, %v235
  %v306 = vpack.c.bf16 %v237, %v237
  %v307 = vpack.c.bf16 %v240, %v240
  %v308 = vpack.c.bf16 %v242, %v242
  %v309 = vpack.c.bf16 %v245, %v245
  %v310 = vpack.c.bf16 %v247, %v247
  %v311 = vpack.c.bf16 %v250, %v250
  %v312 = vpack.c.bf16 %v252, %v252
  %v313 = vpack.c.bf16 %v255, %v255
  %v314 = vpack.c.bf16 %v257, %v257
  %v315 = vpack.c.bf16 %v260, %v260
  %v316 = vpack.c.bf16 %v262, %v262
  %v317 = vpack.c.bf16 %v265, %v265
  %v318 = vpack.c.bf16 %v267, %v267
  %v319 = vpack.c.bf16 %v270, %v270
  %v320 = vpack.c.bf16 %v272, %v272
  %v321 = vpack.c.bf16 %v275, %v275
  %v322 = vpack.c.bf16 %v277, %v277
  %v323 = vpack.c.bf16 %v280, %v280
  %v324 = vpack.c.bf16 %v282, %v282
  %v325 = vpack.c.bf16 %v285, %v285
  %v326 = vpack.c.bf16 %v287, %v287
  %v327 = vpack.c.bf16 %v290, %v290
  %v328 = vpack.c.bf16 %v292, %v292
  %v329 = vpack.c.bf16 %v295, %v295
  %v330 = vpack.c.bf16 %v297, %v297
  %331 = vst [vmem:[%s3] sm:$0xf] %v299
  %332 = vst [vmem:[%s3 + $0x4] sm:$0xf] %v300
  %333 = vst [vmem:[%s3 + $0x8] sm:$0xf] %v301
  %334 = vst [vmem:[%s3 + $0xc] sm:$0xf] %v302
  %335 = vst [vmem:[%s3 + $0x10] sm:$0xf] %v303
  %336 = vst [vmem:[%s3 + $0x14] sm:$0xf] %v304
  %337 = vst [vmem:[%s3 + $0x18] sm:$0xf] %v305
  %338 = vst [vmem:[%s3 + $0x1c] sm:$0xf] %v306
  %339 = vst [vmem:[%s3 + $0x20] sm:$0xf] %v307
  %340 = vst [vmem:[%s3 + $0x24] sm:$0xf] %v308
  %341 = vst [vmem:[%s3 + $0x28] sm:$0xf] %v309
  %342 = vst [vmem:[%s3 + $0x2c] sm:$0xf] %v310
  %343 = vst [vmem:[%s3 + $0x30] sm:$0xf] %v311
  %344 = vst [vmem:[%s3 + $0x34] sm:$0xf] %v312
  %345 = vst [vmem:[%s3 + $0x38] sm:$0xf] %v313
  %346 = vst [vmem:[%s3 + $0x3c] sm:$0xf] %v314
  %347 = vst [vmem:[%s3 + $0x40] sm:$0xf] %v315
  %348 = vst [vmem:[%s3 + $0x44] sm:$0xf] %v316
  %349 = vst [vmem:[%s3 + $0x48] sm:$0xf] %v317
  %350 = vst [vmem:[%s3 + $0x4c] sm:$0xf] %v318
  %351 = vst [vmem:[%s3 + $0x50] sm:$0xf] %v319
  %352 = vst [vmem:[%s3 + $0x54] sm:$0xf] %v320
  %353 = vst [vmem:[%s3 + $0x58] sm:$0xf] %v321
  %354 = vst [vmem:[%s3 + $0x5c] sm:$0xf] %v322
  %355 = vst [vmem:[%s3 + $0x60] sm:$0xf] %v323
  %356 = vst [vmem:[%s3 + $0x64] sm:$0xf] %v324
  %357 = vst [vmem:[%s3 + $0x68] sm:$0xf] %v325
  %358 = vst [vmem:[%s3 + $0x6c] sm:$0xf] %v326
  %359 = vst [vmem:[%s3 + $0x70] sm:$0xf] %v327
  %360 = vst [vmem:[%s3 + $0x74] sm:$0xf] %v328
  %361 = vst [vmem:[%s3 + $0x78] sm:$0xf] %v329
  %362 = vst [vmem:[%s3 + $0x7c] sm:$0xf] %v330
  // Predicated region
  $region14: #{gspherenet_forward.2} parent=0 // pred_check
    _
  $region15: #{gspherenet_forward.2} parent=0 // pred_check_branch
    %364 = sbr.rel (0) target = $region17
  $region16: #{gspherenet_forward.2} parent=0 // pred_region
    _
  $region17: #{gspherenet_forward.2} parent=0 // pred_fallthru
    _
  // Predicated region
  $region18: #{gspherenet_forward.2} parent=0 // pred_check
    _
  $region19: #{gspherenet_forward.2} parent=0 // pred_check_branch
    %366 = sbr.rel (0) target = $region21
  $region20: #{gspherenet_forward.2} parent=0 // pred_region
    _
  $region21: #{gspherenet_forward.2} parent=0 // pred_fallthru
    _

// kernel: gspherenet_forward.3
$region0: #{gspherenet_forward.3}
  #allocation0 [shape = 'u32[]', space=smem, size = 0x4, offset = 0x4, fixed_abs, tag = 'smem constant byte address 0x4 - core index']
  #allocation1 [shape = 'u32[72,128]{1,0:T(1,128)}', space=vmem, size = 0x9000, scoped, tag = 'internal scratch']
  #allocation2 [shape = 'f32[56,128]{1,0:T(8,128)}', space=vmem, size = 0x7000, scoped, tag = 'scratch operand']
  #allocation3 [shape = 's32[1]{0}', space=sflag, size = 0x4, scoped, tag = 'scoped memory for gspherenet_forward.3']
  #allocation4 [shape = 's32[1]{0:T(128)S(6)}', space=smem, size = 0x200, scoped, tag = 'prefetched SMEM operand 0']
  #allocation5 [shape = 's32[1]{0:T(128)S(6)}', space=smem, size = 0x200, scoped, tag = 'prefetched SMEM operand 1']
  %s0 = inlined_call_operand.<no memory space> [shape: s32[1], index: 0, kind: input, shape index: {}]
  %s1 = inlined_call_operand.<no memory space> [shape: s32[1], index: 1, kind: input, shape index: {}]
  %s2 = inlined_call_operand.vmem [shape: s32[1,256], index: 2, kind: input, shape index: {}]
  %s3 = inlined_call_operand.vmem [shape: bf16[256,128], index: 3, kind: input, shape index: {}]
  %s4 = inlined_call_operand.vmem [shape: f32[56,128], index: 4, kind: input, shape index: {}]
  %s5 = inlined_call_operand.vmem [shape: bf16[128,128], index: 5, kind: input, shape index: {}]
  %s6 = inlined_call_operand.vmem [shape: f32[1,128], index: 6, kind: input, shape index: {}]
  %s7 = inlined_call_operand.vmem [shape: bf16[128,128], index: 7, kind: input, shape index: {}]
  %s8 = inlined_call_operand.vmem [shape: f32[1,128], index: 8, kind: input, shape index: {}]
  %s9 = inlined_call_operand.hbm [shape: f32[56,128], index: 9, kind: output, shape index: {}]
  %s10 = sld [smem:[#allocation0]]
  $region50: #{gspherenet_forward.3} parent=0
    _
  %s12 = ssub.s32 1, %s10
  %s13 = scalar_select 0, %s12, %s10
  %14 = sst [smem:[#allocation4]] %s0
  %15 = sst [smem:[#allocation5]] %s1
  $region1: #{gspherenet_forward.3} parent=0
    #allocation6 [shape = 'u8[28672]{0}', space=vmem, size = 0x7000, scoped, tag = 'output window, operand 0, single buffered']
    #allocation7 [shape = 's32[1]{0}', space=sflag, size = 0x4, scoped, tag = 'scoped memory for gspherenet_forward.3']
    %16 = vsyncpa [#allocation7], 0
    // Predicated region
    $region2: #{gspherenet_forward.3} parent=1 // pred_check
      _
    $region3: #{gspherenet_forward.3} parent=1 // pred_check_branch
      %18 = sbr.rel (0) target = $region5
    $region4: #{gspherenet_forward.3} parent=1 // pred_region
      %s19 = sld [smem:[#allocation4]]
      %s20 = sld [smem:[#allocation5]]
      %p21 = scmp.gt.s32.totalorder 0, %s19
      %s22 = scalar_select %p21, 0, %s19
      %p23 = scmp.lt.s32.totalorder %s22, %s20
      %s24 = scalar_select %p23, %s22, %s20
      %s25 = smul.u32 2, %s24
      %p26 = scmp.lt.s32.totalorder %s25, 1
      %s27 = scalar_select %p26, %s25, 1
      %s28 = scalar_lea.vmem %s2, %s27
      %s29 = sld [smem:[#allocation4]]
      %s30 = sld [smem:[#allocation5]]
      %p31 = scmp.gt.s32.totalorder 0, %s29
      %s32 = scalar_select %p31, 0, %s29
      %p33 = scmp.lt.s32.totalorder %s32, %s30
      %s34 = scalar_select %p33, %s32, %s30
      %s35 = smul.u32 2, %s34
    $region5: #{gspherenet_forward.3} parent=1 // pred_fallthru
      _
    // Predicated region
    $region6: #{gspherenet_forward.3} parent=1 // pred_check
      _
    $region7: #{gspherenet_forward.3} parent=1 // pred_check_branch
      %37 = sbr.rel (0) target = $region9
    $region8: #{gspherenet_forward.3} parent=1 // pred_region
      %s38 = sld [smem:[#allocation4]]
      %s39 = sld [smem:[#allocation5]]
      %p40 = scmp.gt.s32.totalorder 0, %s38
      %s41 = scalar_select %p40, 0, %s38
      %p42 = scmp.lt.s32.totalorder %s41, %s39
      %s43 = scalar_select %p42, %s41, %s39
      %s44 = smul.u32 32, %s43
      %p45 = scmp.lt.s32.totalorder %s44, 31
      %s46 = scalar_select %p45, %s44, 31
      %s47 = smul.addr %s46, 4
      %s48 = scalar_lea.vmem %s3, %s47
      %s49 = sld [smem:[#allocation4]]
      %s50 = sld [smem:[#allocation5]]
      %p51 = scmp.gt.s32.totalorder 0, %s49
      %s52 = scalar_select %p51, 0, %s49
      %p53 = scmp.lt.s32.totalorder %s52, %s50
      %s54 = scalar_select %p53, %s52, %s50
      %s55 = smul.u32 32, %s54
    $region9: #{gspherenet_forward.3} parent=1 // pred_fallthru
      _
    // Predicated region
    $region10: #{gspherenet_forward.3} parent=1 // pred_check
      _
    $region11: #{gspherenet_forward.3} parent=1 // pred_check_branch
      %57 = sbr.rel (0) target = $region13
    $region12: #{gspherenet_forward.3} parent=1 // pred_region
      _
    $region13: #{gspherenet_forward.3} parent=1 // pred_fallthru
      _
    // Predicated region
    $region14: #{gspherenet_forward.3} parent=1 // pred_check
      _
    $region15: #{gspherenet_forward.3} parent=1 // pred_check_branch
      %59 = sbr.rel (0) target = $region17
    $region16: #{gspherenet_forward.3} parent=1 // pred_region
      _
    $region17: #{gspherenet_forward.3} parent=1 // pred_fallthru
      _
    // Predicated region
    $region18: #{gspherenet_forward.3} parent=1 // pred_check
      _
    $region19: #{gspherenet_forward.3} parent=1 // pred_check_branch
      %61 = sbr.rel (0) target = $region21
    $region20: #{gspherenet_forward.3} parent=1 // pred_region
      _
    $region21: #{gspherenet_forward.3} parent=1 // pred_fallthru
      _
    // Predicated region
    $region22: #{gspherenet_forward.3} parent=1 // pred_check
      _
    $region23: #{gspherenet_forward.3} parent=1 // pred_check_branch
      %63 = sbr.rel (0) target = $region25
    $region24: #{gspherenet_forward.3} parent=1 // pred_region
      _
    $region25: #{gspherenet_forward.3} parent=1 // pred_fallthru
      _
    // Predicated region
    $region26: #{gspherenet_forward.3} parent=1 // pred_check
      _
    $region27: #{gspherenet_forward.3} parent=1 // pred_check_branch
      %65 = sbr.rel (0) target = $region29
    $region28: #{gspherenet_forward.3} parent=1 // pred_region
      _
    $region29: #{gspherenet_forward.3} parent=1 // pred_fallthru
      _
    %s66 = sld [smem:[#allocation4]]
    %s67 = sld [smem:[#allocation5]]
    %p68 = scmp.gt.s32.totalorder 0, %s66
    %s69 = scalar_select %p68, 0, %s66
    %p70 = scmp.lt.s32.totalorder %s69, %s67
    %s71 = scalar_select %p70, %s69, %s67
    %s72 = smul.u32 2, %s71
    %p73 = scmp.lt.s32.totalorder %s72, 1
    %s74 = scalar_select %p73, %s72, 1
    %s75 = scalar_lea.vmem %s2, %s74
    %s76 = sld [smem:[#allocation4]]
    %s77 = sld [smem:[#allocation5]]
    %p78 = scmp.gt.s32.totalorder 0, %s76
    %s79 = scalar_select %p78, 0, %s76
    %p80 = scmp.lt.s32.totalorder %s79, %s77
    %s81 = scalar_select %p80, %s79, %s77
    %s82 = smul.u32 32, %s81
    %p83 = scmp.lt.s32.totalorder %s82, 31
    %s84 = scalar_select %p83, %s82, 31
    %s85 = smul.addr %s84, 4
    %s86 = scalar_lea.vmem %s3, %s85
    %s87 = sld [smem:[#allocation4]]
    %s88 = sld [smem:[#allocation5]]
    %p89 = scmp.gt.s32.totalorder 0, %s87
    %s90 = scalar_select %p89, 0, %s87
    %p91 = scmp.lt.s32.totalorder %s90, %s88
    %s92 = scalar_select %p91, %s90, %s88
    %s93 = smul.u32 2, %s92
    %p94 = scmp.lt.s32.totalorder %s93, 1
    %s95 = scalar_select %p94, %s93, 1
    %s96 = scalar_lea.vmem %s2, %s95
    %s97 = sld [smem:[#allocation4]]
    %s98 = sld [smem:[#allocation5]]
    %p99 = scmp.gt.s32.totalorder 0, %s97
    %s100 = scalar_select %p99, 0, %s97
    %p101 = scmp.lt.s32.totalorder %s100, %s98
    %s102 = scalar_select %p101, %s100, %s98
    %s103 = smul.u32 2, %s102
    %s104 = sld [smem:[#allocation4]]
    %s105 = sld [smem:[#allocation5]]
    %p106 = scmp.gt.s32.totalorder 0, %s104
    %s107 = scalar_select %p106, 0, %s104
    %p108 = scmp.lt.s32.totalorder %s107, %s105
    %s109 = scalar_select %p108, %s107, %s105
    %s110 = smul.u32 32, %s109
    %p111 = scmp.lt.s32.totalorder %s110, 31
    %s112 = scalar_select %p111, %s110, 31
    %s113 = smul.addr %s112, 4
    %s114 = scalar_lea.vmem %s3, %s113
    %s115 = sld [smem:[#allocation4]]
    %s116 = sld [smem:[#allocation5]]
    %p117 = scmp.gt.s32.totalorder 0, %s115
    %s118 = scalar_select %p117, 0, %s115
    %p119 = scmp.lt.s32.totalorder %s118, %s116
    %s120 = scalar_select %p119, %s118, %s116
    %s121 = smul.u32 32, %s120
    %p122 = scmp.eq.s32.totalorder 0, 0
    // Predicated region
    $region30: #{gspherenet_forward.3} parent=1 // pred_check
      %p123 = pneg %p122
    $region31: #{gspherenet_forward.3} parent=1 // pred_check_branch
      %125 = sbr.rel (%p123) target = $region33
    $region32: #{gspherenet_forward.3} parent=1 // pred_region
      %126 = vst [vmem:[#allocation2] sm:$0xff] 0.0
      %127 = vst [vmem:[#allocation2 + $0x8] sm:$0xff] 0.0
      %128 = vst [vmem:[#allocation2 + $0x10] sm:$0xff] 0.0
      %129 = vst [vmem:[#allocation2 + $0x18] sm:$0xff] 0.0
      %130 = vst [vmem:[#allocation2 + $0x20] sm:$0xff] 0.0
      %131 = vst [vmem:[#allocation2 + $0x28] sm:$0xff] 0.0
      %132 = vst [vmem:[#allocation2 + $0x30] sm:$0xff] 0.0
    $region33: #{gspherenet_forward.3} parent=1 // pred_fallthru
      _
    %s133 = sld [smem:[#allocation4]]
    %p134 = scmp.ge.s32.totalorder 0, %s133
    %s135 = sld [smem:[#allocation5]]
    %p136 = scmp.le.s32.totalorder 0, %s135
    %p137 = pnand %p134, %p136
    %p138 = pneg %p137
    // Predicated region
    $region34: #{gspherenet_forward.3} parent=1 // pred_check
      _
    $region35: #{gspherenet_forward.3} parent=1 // pred_check_branch
      %140 = sbr.rel (%p137) target = $region37
    $region36: #{gspherenet_forward.3} parent=1 // pred_region
      %v141 = vld [vmem:[%s96] sm:$0x3]
      %s142 = smul.u32 0, 56
      %v143 = vlaneseq
      %v144 = vshrl.u32 %v143, 7
      %v145 = vadd.s32 %v144, 8
      %v146 = vadd.s32 %v144, 16
      %v147 = vadd.s32 %v144, 24
      %v148 = vadd.s32 %v144, 32
      %v149 = vadd.s32 %v144, 40
      %v150 = vadd.s32 %v144, 48
      %v151 = vstv %s142
      %v152 = vadd.s32 %v151, %v144
      %v153 = vadd.s32 %v151, %v145
      %v154 = vadd.s32 %v151, %v146
      %v155 = vadd.s32 %v151, %v147
      %v156 = vadd.s32 %v151, %v148
      %v157 = vadd.s32 %v151, %v149
      %v158 = vadd.s32 %v151, %v150
      %v159 = vperm.slane %v141, 0
      %v160 = vperm.slane %v141, 1
      %vm161 = vcmp.eq.s32.totalorder %v152, %v159
      %vm162 = vcmp.eq.s32.totalorder %v152, %v160
      %vm163 = vcmp.eq.s32.totalorder %v153, %v159
      %vm164 = vcmp.eq.s32.totalorder %v153, %v160
      %vm165 = vcmp.eq.s32.totalorder %v154, %v159
      %vm166 = vcmp.eq.s32.totalorder %v154, %v160
      %vm167 = vcmp.eq.s32.totalorder %v155, %v159
      %vm168 = vcmp.eq.s32.totalorder %v155, %v160
      %vm169 = vcmp.eq.s32.totalorder %v156, %v159
      %vm170 = vcmp.eq.s32.totalorder %v156, %v160
      %vm171 = vcmp.eq.s32.totalorder %v157, %v159
      %vm172 = vcmp.eq.s32.totalorder %v157, %v160
      %vm173 = vcmp.eq.s32.totalorder %v158, %v159
      %vm174 = vcmp.eq.s32.totalorder %v158, %v160
      %v175 = vsel %vm161, 1, 0
      %v176 = vsel %vm162, 1, 0
      %v177 = vsel %vm163, 1, 0
      %v178 = vsel %vm164, 1, 0
      %v179 = vsel %vm165, 1, 0
      %v180 = vsel %vm166, 1, 0
      %v181 = vsel %vm167, 1, 0
      %v182 = vsel %vm168, 1, 0
      %v183 = vsel %vm169, 1, 0
      %v184 = vsel %vm170, 1, 0
      %v185 = vsel %vm171, 1, 0
      %v186 = vsel %vm172, 1, 0
      %v187 = vsel %vm173, 1, 0
      %v188 = vsel %vm174, 1, 0
      %v189 = vcvt.s32.f32 %v175
      %v190 = vcvt.s32.f32 %v176
      %v191 = vcvt.s32.f32 %v177
      %v192 = vcvt.s32.f32 %v178
      %v193 = vcvt.s32.f32 %v179
      %v194 = vcvt.s32.f32 %v180
      %v195 = vcvt.s32.f32 %v181
      %v196 = vcvt.s32.f32 %v182
      %v197 = vcvt.s32.f32 %v183
      %v198 = vcvt.s32.f32 %v184
      %v199 = vcvt.s32.f32 %v185
      %v200 = vcvt.s32.f32 %v186
      %v201 = vcvt.s32.f32 %v187
      %v202 = vcvt.s32.f32 %v188
      %v203 = vpack.c.bf16 %v191, %v189
      %v204 = vpack.c.bf16 %v192, %v190
      %v205 = vpack.c.bf16 %v195, %v193
      %v206 = vpack.c.bf16 %v196, %v194
      %v207 = vpack.c.bf16 %v199, %v197
      %v208 = vpack.c.bf16 %v200, %v198
      %v209 = vpack.c.bf16 %v201, %v201
      %v210 = vpack.c.bf16 %v202, %v202
      %v211 = vld [vmem:[#allocation2] sm:$0xff]
      %v212 = vld [vmem:[#allocation2 + $0x8] sm:$0xff]
      %v213 = vld [vmem:[#allocation2 + $0x10] sm:$0xff]
      %v214 = vld [vmem:[#allocation2 + $0x18] sm:$0xff]
      %v215 = vld [vmem:[#allocation2 + $0x20] sm:$0xff]
      %v216 = vld [vmem:[#allocation2 + $0x28] sm:$0xff]
      %v217 = vld [vmem:[#allocation2 + $0x30] sm:$0xff]
      %v218 = vld [vmem:[%s114] sm:$0xf]
      %v219 = vld [vmem:[%s114 + $0x4] sm:$0xf]
      %v220 = vld [vmem:[%s114 + $0x8] sm:$0xf]
      %v221 = vld [vmem:[%s114 + $0xc] sm:$0xf]
      %v222 = vld [vmem:[%s114 + $0x10] sm:$0xf]
      %v223 = vld [vmem:[%s114 + $0x14] sm:$0xf]
      %v224 = vld [vmem:[%s114 + $0x18] sm:$0xf]
      %v225 = vld [vmem:[%s114 + $0x1c] sm:$0xf]
      %v226 = vld [vmem:[%s114 + $0x20] sm:$0xf]
      %v227 = vld [vmem:[%s114 + $0x24] sm:$0xf]
      %v228 = vld [vmem:[%s114 + $0x28] sm:$0xf]
      %v229 = vld [vmem:[%s114 + $0x2c] sm:$0xf]
      %v230 = vld [vmem:[%s114 + $0x30] sm:$0xf]
      %v231 = vld [vmem:[%s114 + $0x34] sm:$0xf]
      %v232 = vld [vmem:[%s114 + $0x38] sm:$0xf]
      %v233 = vld [vmem:[%s114 + $0x3c] sm:$0xf]
      %v234 = vld [vmem:[%s114 + $0x40] sm:$0xf]
      %v235 = vld [vmem:[%s114 + $0x44] sm:$0xf]
      %v236 = vld [vmem:[%s114 + $0x48] sm:$0xf]
      %v237 = vld [vmem:[%s114 + $0x4c] sm:$0xf]
      %v238 = vld [vmem:[%s114 + $0x50] sm:$0xf]
      %v239 = vld [vmem:[%s114 + $0x54] sm:$0xf]
      %v240 = vld [vmem:[%s114 + $0x58] sm:$0xf]
      %v241 = vld [vmem:[%s114 + $0x5c] sm:$0xf]
      %v242 = vld [vmem:[%s114 + $0x60] sm:$0xf]
      %v243 = vld [vmem:[%s114 + $0x64] sm:$0xf]
      %v244 = vld [vmem:[%s114 + $0x68] sm:$0xf]
      %v245 = vld [vmem:[%s114 + $0x6c] sm:$0xf]
      %v246 = vld [vmem:[%s114 + $0x70] sm:$0xf]
      %v247 = vld [vmem:[%s114 + $0x74] sm:$0xf]
      %v248 = vld [vmem:[%s114 + $0x78] sm:$0xf]
      %v249 = vld [vmem:[%s114 + $0x7c] sm:$0xf]
      %v282 = vunpack.c.l.b16 %v218
      %v283 = vunpack.c.l.b16 %v219
      %v284 = vunpack.c.l.b16 %v220
      %v285 = vunpack.c.l.b16 %v221
      %v286 = vunpack.c.l.b16 %v222
      %v287 = vunpack.c.l.b16 %v223
      %v288 = vunpack.c.l.b16 %v224
      %v289 = vunpack.c.l.b16 %v225
      %v290 = vunpack.c.l.b16 %v226
      %v291 = vunpack.c.l.b16 %v227
      %v292 = vunpack.c.l.b16 %v228
      %v293 = vunpack.c.l.b16 %v229
      %v294 = vunpack.c.l.b16 %v230
      %v295 = vunpack.c.l.b16 %v231
      %v296 = vunpack.c.l.b16 %v232
      %v297 = vunpack.c.l.b16 %v233
      %v298 = vunpack.c.l.b16 %v234
      %v299 = vunpack.c.l.b16 %v235
      %v300 = vunpack.c.l.b16 %v236
      %v301 = vunpack.c.l.b16 %v237
      %v302 = vunpack.c.l.b16 %v238
      %v303 = vunpack.c.l.b16 %v239
      %v304 = vunpack.c.l.b16 %v240
      %v305 = vunpack.c.l.b16 %v241
      %v306 = vunpack.c.l.b16 %v242
      %v307 = vunpack.c.l.b16 %v243
      %v308 = vunpack.c.l.b16 %v244
      %v309 = vunpack.c.l.b16 %v245
      %v310 = vunpack.c.l.b16 %v246
      %v311 = vunpack.c.l.b16 %v247
      %v312 = vunpack.c.l.b16 %v248
      %v313 = vunpack.c.l.b16 %v249
      %v314 = vpack.c.b16 %v283, %v282
      %v315 = vpack.c.b16 %v285, %v284
      %v316 = vpack.c.b16 %v287, %v286
      %v317 = vpack.c.b16 %v289, %v288
      %v318 = vpack.c.b16 %v291, %v290
      %v319 = vpack.c.b16 %v293, %v292
      %v320 = vpack.c.b16 %v295, %v294
      %v321 = vpack.c.b16 %v297, %v296
      %v322 = vpack.c.b16 %v299, %v298
      %v323 = vpack.c.b16 %v301, %v300
      %v324 = vpack.c.b16 %v303, %v302
      %v325 = vpack.c.b16 %v305, %v304
      %v326 = vpack.c.b16 %v307, %v306
      %v327 = vpack.c.b16 %v309, %v308
      %v328 = vpack.c.b16 %v311, %v310
      %v329 = vpack.c.b16 %v313, %v312
      %346 = vmatpush.bf16.msra.mxu0 %v321
      %347 = vmatpush.bf16.msra.mxu0 %v320
      %348 = vmatpush.bf16.msra.mxu0 %v319
      %349 = vmatpush.bf16.msra.mxu0 %v318
      %350 = vmatpush.bf16.msra.mxu0 %v317
      %351 = vmatpush.bf16.msra.mxu0 %v316
      %352 = vmatpush.bf16.msra.mxu0 %v315
      %353 = vmatpush.bf16.msra.mxu0 %v314
      %354 = vmatmul.bf16.gmra.mxu0 %v203
      %v355 = vpop.f32.mrf.mxu0
      %v356 = vadd.f32 0.0, %v355
      %v357 = vpop.f32.mrf.mxu0
      %v358 = vadd.f32 0.0, %v357
      %359 = vmatmul.bf16.gmra.mxu0 %v205
      %v360 = vpop.f32.mrf.mxu0
      %v361 = vadd.f32 0.0, %v360
      %v362 = vpop.f32.mrf.mxu0
      %v363 = vadd.f32 0.0, %v362
      %364 = vmatmul.bf16.gmra.mxu0 %v207
      %v365 = vpop.f32.mrf.mxu0
      %v366 = vadd.f32 0.0, %v365
      %v367 = vpop.f32.mrf.mxu0
      %v368 = vadd.f32 0.0, %v367
      %369 = vmatmul.bf16.gmra.mxu0 %v209
      %v370 = vpop.f32.mrf.mxu0
      %v371 = vadd.f32 0.0, %v370
      %v372 = vpop.f32.mrf.mxu0
      %373 = vdwg.mxu0
      %374 = vmatpush.bf16.msra.mxu0 %v329
      %375 = vmatpush.bf16.msra.mxu0 %v328
      %376 = vmatpush.bf16.msra.mxu0 %v327
      %377 = vmatpush.bf16.msra.mxu0 %v326
      %378 = vmatpush.bf16.msra.mxu0 %v325
      %379 = vmatpush.bf16.msra.mxu0 %v324
      %380 = vmatpush.bf16.msra.mxu0 %v323
      %381 = vmatpush.bf16.msra.mxu0 %v322
      %382 = vmatmul.bf16.gmra.mxu0 %v204
      %v383 = vpop.f32.mrf.mxu0
      %v384 = vadd.f32 %v356, %v383
      %v385 = vpop.f32.mrf.mxu0
      %v386 = vadd.f32 %v358, %v385
      %387 = vmatmul.bf16.gmra.mxu0 %v206
      %v388 = vpop.f32.mrf.mxu0
      %v389 = vadd.f32 %v361, %v388
      %v390 = vpop.f32.mrf.mxu0
      %v391 = vadd.f32 %v363, %v390
      %392 = vmatmul.bf16.gmra.mxu0 %v208
      %v393 = vpop.f32.mrf.mxu0
      %v394 = vadd.f32 %v366, %v393
      %v395 = vpop.f32.mrf.mxu0
      %v396 = vadd.f32 %v368, %v395
      %397 = vmatmul.bf16.gmra.mxu0 %v210
      %v398 = vpop.f32.mrf.mxu0
      %v399 = vadd.f32 %v371, %v398
      %v400 = vpop.f32.mrf.mxu0
      %401 = vdwg.mxu0
      %v402 = vadd.f32 %v211, %v384
      %v403 = vadd.f32 %v212, %v386
      %v404 = vadd.f32 %v213, %v389
      %v405 = vadd.f32 %v214, %v391
      %v406 = vadd.f32 %v215, %v394
      %v407 = vadd.f32 %v216, %v396
      %v408 = vadd.f32 %v217, %v399
      %409 = vst [vmem:[#allocation2] sm:$0xff] %v402
      %410 = vst [vmem:[#allocation2 + $0x8] sm:$0xff] %v403
      %411 = vst [vmem:[#allocation2 + $0x10] sm:$0xff] %v404
      %412 = vst [vmem:[#allocation2 + $0x18] sm:$0xff] %v405
      %413 = vst [vmem:[#allocation2 + $0x20] sm:$0xff] %v406
      %414 = vst [vmem:[#allocation2 + $0x28] sm:$0xff] %v407
      %415 = vst [vmem:[#allocation2 + $0x30] sm:$0xff] %v408
    $region37: #{gspherenet_forward.3} parent=1 // pred_fallthru
      _
    // Predicated region
    $region38: #{gspherenet_forward.3} parent=1 // pred_check
      %p416 = pneg %p122
    $region39: #{gspherenet_forward.3} parent=1 // pred_check_branch
      %418 = sbr.rel (%p416) target = $region41
    $region40: #{gspherenet_forward.3} parent=1 // pred_region
      %v419 = vld [vmem:[#allocation2] sm:$0xff]
      %v420 = vld [vmem:[#allocation2 + $0x8] sm:$0xff]
      %v421 = vld [vmem:[#allocation2 + $0x10] sm:$0xff]
      %v422 = vld [vmem:[#allocation2 + $0x18] sm:$0xff]
      %v423 = vld [vmem:[#allocation2 + $0x20] sm:$0xff]
      %v424 = vld [vmem:[#allocation2 + $0x28] sm:$0xff]
      %v425 = vld [vmem:[#allocation2 + $0x30] sm:$0xff]
      %v426 = vpack.c.bf16 %v420, %v419
      %v427 = vpack.c.bf16 %v422, %v421
      %v428 = vpack.c.bf16 %v424, %v423
      %v429 = vpack.c.bf16 %v425, %v425
      %v430 = vld [vmem:[%s5] sm:$0xf]
      %v431 = vld [vmem:[%s5 + $0x4] sm:$0xf]
      %v432 = vld [vmem:[%s5 + $0x8] sm:$0xf]
      %v433 = vld [vmem:[%s5 + $0xc] sm:$0xf]
      %v434 = vld [vmem:[%s5 + $0x10] sm:$0xf]
      %v435 = vld [vmem:[%s5 + $0x14] sm:$0xf]
      %v436 = vld [vmem:[%s5 + $0x18] sm:$0xf]
      %v437 = vld [vmem:[%s5 + $0x1c] sm:$0xf]
      %v438 = vld [vmem:[%s5 + $0x20] sm:$0xf]
      %v439 = vld [vmem:[%s5 + $0x24] sm:$0xf]
      %v440 = vld [vmem:[%s5 + $0x28] sm:$0xf]
      %v441 = vld [vmem:[%s5 + $0x2c] sm:$0xf]
      %v442 = vld [vmem:[%s5 + $0x30] sm:$0xf]
      %v443 = vld [vmem:[%s5 + $0x34] sm:$0xf]
      %v444 = vld [vmem:[%s5 + $0x38] sm:$0xf]
      %v445 = vld [vmem:[%s5 + $0x3c] sm:$0xf]
      %v446 = vld [vmem:[%s6] sm:$0x1]
      %v448 = vperm.slane %v446, 0
      %v466 = vunpack.c.l.b16 %v430
      %v467 = vunpack.c.l.b16 %v431
      %v468 = vunpack.c.l.b16 %v432
      %v469 = vunpack.c.l.b16 %v433
      %v470 = vunpack.c.l.b16 %v434
      %v471 = vunpack.c.l.b16 %v435
      %v472 = vunpack.c.l.b16 %v436
      %v473 = vunpack.c.l.b16 %v437
      %v474 = vunpack.c.l.b16 %v438
      %v475 = vunpack.c.l.b16 %v439
      %v476 = vunpack.c.l.b16 %v440
      %v477 = vunpack.c.l.b16 %v441
      %v478 = vunpack.c.l.b16 %v442
      %v479 = vunpack.c.l.b16 %v443
      %v480 = vunpack.c.l.b16 %v444
      %v481 = vunpack.c.l.b16 %v445
      %v482 = vpack.c.b16 %v467, %v466
      %v483 = vpack.c.b16 %v469, %v468
      %v484 = vpack.c.b16 %v471, %v470
      %v485 = vpack.c.b16 %v473, %v472
      %v486 = vpack.c.b16 %v475, %v474
      %v487 = vpack.c.b16 %v477, %v476
      %v488 = vpack.c.b16 %v479, %v478
      %v489 = vpack.c.b16 %v481, %v480
      %498 = vmatpush.bf16.msra.mxu0 %v489
      %499 = vmatpush.bf16.msra.mxu0 %v488
      %500 = vmatpush.bf16.msra.mxu0 %v487
      %501 = vmatpush.bf16.msra.mxu0 %v486
      %502 = vmatpush.bf16.msra.mxu0 %v485
      %503 = vmatpush.bf16.msra.mxu0 %v484
      %504 = vmatpush.bf16.msra.mxu0 %v483
      %505 = vmatpush.bf16.msra.mxu0 %v482
      %506 = vmatmul.bf16.gmra.mxu0 %v426
      %v507 = vpop.f32.mrf.mxu0
      %v508 = vadd.f32 %v448, %v507
      %v509 = vpop.f32.mrf.mxu0
      %v510 = vadd.f32 %v448, %v509
      %511 = vmatmul.bf16.gmra.mxu0 %v427
      %v512 = vpop.f32.mrf.mxu0
      %v513 = vadd.f32 %v448, %v512
      %v514 = vpop.f32.mrf.mxu0
      %v515 = vadd.f32 %v448, %v514
      %516 = vmatmul.bf16.gmra.mxu0 %v428
      %v517 = vpop.f32.mrf.mxu0
      %v518 = vadd.f32 %v448, %v517
      %v519 = vpop.f32.mrf.mxu0
      %v520 = vadd.f32 %v448, %v519
      %521 = vmatmul.bf16.gmra.mxu0 %v429
      %v522 = vpop.f32.mrf.mxu0
      %v523 = vadd.f32 %v448, %v522
      %v524 = vpop.f32.mrf.mxu0
      %525 = vdwg.mxu0
      %v526 = vmax.f32 %v508, 0.0
      %v527 = vmax.f32 %v510, 0.0
      %v528 = vmax.f32 %v513, 0.0
      %v529 = vmax.f32 %v515, 0.0
      %v530 = vmax.f32 %v518, 0.0
      %v531 = vmax.f32 %v520, 0.0
      %v532 = vmax.f32 %v523, 0.0
      %v533 = vpack.c.bf16 %v527, %v526
      %v534 = vpack.c.bf16 %v529, %v528
      %v535 = vpack.c.bf16 %v531, %v530
      %v536 = vpack.c.bf16 %v532, %v532
      %v537 = vld [vmem:[%s7] sm:$0xf]
      %v538 = vld [vmem:[%s7 + $0x4] sm:$0xf]
      %v539 = vld [vmem:[%s7 + $0x8] sm:$0xf]
      %v540 = vld [vmem:[%s7 + $0xc] sm:$0xf]
      %v541 = vld [vmem:[%s7 + $0x10] sm:$0xf]
      %v542 = vld [vmem:[%s7 + $0x14] sm:$0xf]
      %v543 = vld [vmem:[%s7 + $0x18] sm:$0xf]
      %v544 = vld [vmem:[%s7 + $0x1c] sm:$0xf]
      %v545 = vld [vmem:[%s7 + $0x20] sm:$0xf]
      %v546 = vld [vmem:[%s7 + $0x24] sm:$0xf]
      %v547 = vld [vmem:[%s7 + $0x28] sm:$0xf]
      %v548 = vld [vmem:[%s7 + $0x2c] sm:$0xf]
      %v549 = vld [vmem:[%s7 + $0x30] sm:$0xf]
      %v550 = vld [vmem:[%s7 + $0x34] sm:$0xf]
      %v551 = vld [vmem:[%s7 + $0x38] sm:$0xf]
      %v552 = vld [vmem:[%s7 + $0x3c] sm:$0xf]
      %v553 = vld [vmem:[%s8] sm:$0x1]
      %v555 = vperm.slane %v553, 0
      %v573 = vunpack.c.l.b16 %v537
      %v574 = vunpack.c.l.b16 %v538
      %v575 = vunpack.c.l.b16 %v539
      %v576 = vunpack.c.l.b16 %v540
      %v577 = vunpack.c.l.b16 %v541
      %v578 = vunpack.c.l.b16 %v542
      %v579 = vunpack.c.l.b16 %v543
      %v580 = vunpack.c.l.b16 %v544
      %v581 = vunpack.c.l.b16 %v545
      %v582 = vunpack.c.l.b16 %v546
      %v583 = vunpack.c.l.b16 %v547
      %v584 = vunpack.c.l.b16 %v548
      %v585 = vunpack.c.l.b16 %v549
      %v586 = vunpack.c.l.b16 %v550
      %v587 = vunpack.c.l.b16 %v551
      %v588 = vunpack.c.l.b16 %v552
      %v589 = vpack.c.b16 %v574, %v573
      %v590 = vpack.c.b16 %v576, %v575
      %v591 = vpack.c.b16 %v578, %v577
      %v592 = vpack.c.b16 %v580, %v579
      %v593 = vpack.c.b16 %v582, %v581
      %v594 = vpack.c.b16 %v584, %v583
      %v595 = vpack.c.b16 %v586, %v585
      %v596 = vpack.c.b16 %v588, %v587
      %605 = vmatpush.bf16.msra.mxu0 %v596
      %606 = vmatpush.bf16.msra.mxu0 %v595
      %607 = vmatpush.bf16.msra.mxu0 %v594
      %608 = vmatpush.bf16.msra.mxu0 %v593
      %609 = vmatpush.bf16.msra.mxu0 %v592
      %610 = vmatpush.bf16.msra.mxu0 %v591
      %611 = vmatpush.bf16.msra.mxu0 %v590
      %612 = vmatpush.bf16.msra.mxu0 %v589
      %613 = vmatmul.bf16.gmra.mxu0 %v533
      %v614 = vpop.f32.mrf.mxu0
      %v615 = vadd.f32 %v555, %v614
      %v616 = vpop.f32.mrf.mxu0
      %v617 = vadd.f32 %v555, %v616
      %618 = vmatmul.bf16.gmra.mxu0 %v534
      %v619 = vpop.f32.mrf.mxu0
      %v620 = vadd.f32 %v555, %v619
      %v621 = vpop.f32.mrf.mxu0
      %v622 = vadd.f32 %v555, %v621
      %623 = vmatmul.bf16.gmra.mxu0 %v535
      %v624 = vpop.f32.mrf.mxu0
      %v625 = vadd.f32 %v555, %v624
      %v626 = vpop.f32.mrf.mxu0
      %v627 = vadd.f32 %v555, %v626
      %628 = vmatmul.bf16.gmra.mxu0 %v536
      %v629 = vpop.f32.mrf.mxu0
      %v630 = vadd.f32 %v555, %v629
      %v631 = vpop.f32.mrf.mxu0
      %632 = vdwg.mxu0
      %v633 = vld [vmem:[%s4] sm:$0xff]
      %v634 = vld [vmem:[%s4 + $0x8] sm:$0xff]
      %v635 = vld [vmem:[%s4 + $0x10] sm:$0xff]
      %v636 = vld [vmem:[%s4 + $0x18] sm:$0xff]
      %v637 = vld [vmem:[%s4 + $0x20] sm:$0xff]
      %v638 = vld [vmem:[%s4 + $0x28] sm:$0xff]
      %v639 = vld [vmem:[%s4 + $0x30] sm:$0xff]
      %v640 = vadd.f32 %v633, %v615
      %v641 = vadd.f32 %v634, %v617
      %v642 = vadd.f32 %v635, %v620
      %v643 = vadd.f32 %v636, %v622
      %v644 = vadd.f32 %v637, %v625
      %v645 = vadd.f32 %v638, %v627
      %v646 = vadd.f32 %v639, %v630
      %647 = vst [vmem:[#allocation6] sm:$0xff] %v640
      %648 = vst [vmem:[#allocation6 + $0x8] sm:$0xff] %v641
      %649 = vst [vmem:[#allocation6 + $0x10] sm:$0xff] %v642
      %650 = vst [vmem:[#allocation6 + $0x18] sm:$0xff] %v643
      %651 = vst [vmem:[#allocation6 + $0x20] sm:$0xff] %v644
      %652 = vst [vmem:[#allocation6 + $0x28] sm:$0xff] %v645
      %653 = vst [vmem:[#allocation6 + $0x30] sm:$0xff] %v646
    $region41: #{gspherenet_forward.3} parent=1 // pred_fallthru
      _
    // Predicated region
    $region42: #{gspherenet_forward.3} parent=1 // pred_check
      _
    $region43: #{gspherenet_forward.3} parent=1 // pred_check_branch
      %655 = sbr.rel (0) target = $region45
    $region44: #{gspherenet_forward.3} parent=1 // pred_region
      %657 = vsyncadd [#allocation7], 0
      %s658 = sshll.u32 [#allocation6], 4
      %s659 = int_to_ptr.vmem [resolvable:$true] %s658
      %s660 = sshll.u32 %s9, 4
      %s661 = int_to_ptr.hbm [resolvable:$true] %s660
      %666 = dma.vmem_to_hbm [thread:$0]  %s659, 896, %s661, [#allocation7], 128, 128, 8
    $region45: #{gspherenet_forward.3} parent=1 // pred_fallthru
      _
    // Predicated region
    $region46: #{gspherenet_forward.3} parent=1 // pred_check
      _
    $region47: #{gspherenet_forward.3} parent=1 // pred_check_branch
      %668 = sbr.rel (0) target = $region49
    $region48: #{gspherenet_forward.3} parent=1 // pred_region
      %670 = dma.done [#allocation7], 896
    $region49: #{gspherenet_forward.3} parent=1 // pred_fallthru
      _
    %671 = vsyncpa [#allocation7], 1

</llo_original>
